<compile_context>
chip_gen: v5e
topology: v5e:2x2
jax: 0.10.0
libtpu: 0.0.40
codegen_flags: <defaults>
</compile_context>

<pallas_src>
import functools

import jax
import jax.numpy as jnp
from jax import lax
from jax.experimental import pallas as pl
from jax.experimental.pallas import tpu as pltpu

PAD = 4  # DataAug(da_type=1) -> RandomShiftsAug(pad=4)

# Flipped to False (once, process-wide) if the lane-dense layout fails to lower.
_LANE_DENSE_OK = True


def _round_up(a, m):
    return (a + m - 1) // m * m


def _build_shift_tables(n, pad, dtype):
    """All (2*pad+1) selection matrices for one spatial axis: (S, n_out, n_in).

    table[s, i, i'] is the sampling weight of input index i' for output index
    i, reproducing: replicate-pad by `pad`, then bilinear grid_sample with
    align_corners=False and padding_mode='zeros', for an integer pixel shift s.
    (The PyTorch module's normalized grid unnormalizes exactly to pix = i + s.)
    For integer s every row is exactly one-hot (0/1), so casting to bf16 is
    exact.  Built once in the wrapper (outside the kernel).
    """
    n_pad = n + 2 * pad
    s = jnp.arange(2 * pad + 1, dtype=jnp.float32)[:, None, None]   # (S,1,1)
    out_i = jnp.arange(n, dtype=jnp.float32)[None, :, None]         # (1,n,1)
    in_i = jnp.arange(n, dtype=jnp.float32)[None, None, :]          # (1,1,n)
    pix = out_i + s                       # exact padded-axis sample position
    p0 = jnp.floor(pix)
    w1 = pix - p0
    w0 = 1.0 - w1
    p1 = p0 + 1.0
    # padding_mode='zeros': taps outside the padded image get zero weight.
    v0 = ((p0 >= 0.0) & (p0 <= n_pad - 1.0)).astype(jnp.float32)
    v1 = ((p1 >= 0.0) & (p1 <= n_pad - 1.0)).astype(jnp.float32)
    # replicate padding: padded index -> clamped original index.
    c0 = jnp.clip(p0 - pad, 0.0, n - 1.0)
    c1 = jnp.clip(p1 - pad, 0.0, n - 1.0)
    tab = (w0 * v0) * (in_i == c0).astype(jnp.float32) \
        + (w1 * v1) * (in_i == c1).astype(jnp.float32)
    return tab.astype(dtype)


def _shift_aug_kernel(shift_ref, x_ref, ry_ref, cxT_ref, o_ref, *,
                      block_b, c, h, w, lane_dense):
    bstep = pl.program_id(0)
    hw = h * w

    def body(i, carry):
        g = bstep * block_b + i
        sx = shift_ref[2 * g]        # shift along W
        sy = shift_ref[2 * g + 1]    # shift along H

        # Precomputed one-hot selection matrices (dynamic first-axis load).
        ry = ry_ref[sy]              # (H_out, H_in)
        cxT = cxT_ref[sx]            # (W_in, W_out), pre-transposed

        xb = x_ref[i]                # lane_dense: (C, H*W)  else: (C, H, W)
        xm = xb.reshape(c * h, w)

        # W-side contraction: one MXU matmul with M = C*H.
        t = jnp.dot(xm, cxT, preferred_element_type=jnp.float32)
        t = t.astype(xb.dtype)       # exact: weights are 0/1

        # H-side contraction, channel by channel.  The same (H, H) matrix is
        # reused for every channel -- no (C, H, H) broadcast materialization.
        rows = []
        for cc in range(c):
            ucc = jnp.dot(ry, t[cc * h:(cc + 1) * h, :],
                          preferred_element_type=jnp.float32)
            ucc = ucc.astype(o_ref.dtype)                    # (H, W)
            rows.append(ucc.reshape(1, hw) if lane_dense else ucc[None])
        out = jnp.concatenate(rows, axis=0)   # (C, H*W) or (C, H, W)
        o_ref[i] = out
        return carry

    # Small compile-time trip count -> unrolled for LLO scheduling visibility.
    lax.fori_loop(0, block_b, body, 0, unroll=min(block_b, 8))


def _data_aug_call(x, shift_flat, ry_all, cxT_all, *, block_b, lane_dense,
                   vmem_limit):
    """One pallas_call over batch-blocks; x is (N_pad, C, H, W), N_pad % block_b == 0."""
    n_pad, c, h, w = x.shape
    hw = h * w
    dtype = x.dtype
    item = jnp.dtype(dtype).itemsize
    s_tab = ry_all.shape[0]
    grid = (n_pad // block_b,)

    if lane_dense:
        x_in = x.reshape(n_pad, c, hw)                 # free reshape of NCHW
        img_block = (block_b, c, hw)
        out_shape = jax.ShapeDtypeStruct((n_pad, c, hw), dtype)
        img_map = lambda b, s: (b, 0, 0)
    else:
        x_in = x
        img_block = (block_b, c, h, w)
        out_shape = jax.ShapeDtypeStruct((n_pad, c, h, w), dtype)
        img_map = lambda b, s: (b, 0, 0, 0)

    kernel = functools.partial(_shift_aug_kernel, block_b=block_b, c=c, h=h,
                               w=w, lane_dense=lane_dense)

    grid_spec = pltpu.PrefetchScalarGridSpec(
        num_scalar_prefetch=1,
        grid=grid,
        in_specs=[
            pl.BlockSpec(img_block, img_map),
            # Weight tables: full arrays, constant block index -> resident.
            pl.BlockSpec((s_tab, h, h), lambda b, s: (0, 0, 0)),
            pl.BlockSpec((s_tab, w, w), lambda b, s: (0, 0, 0)),
        ],
        out_specs=pl.BlockSpec(img_block, img_map),
    )

    # Memory-bound workload: advertise flops/bytes so XLA can schedule around it.
    flops = 2 * n_pad * c * hw * (h + w)
    bytes_accessed = (2 * n_pad * c * hw * item
                      + int(shift_flat.size) * 4
                      + s_tab * (h * h + w * w) * item)
    cost = pl.CostEstimate(flops=flops, transcendentals=0,
                           bytes_accessed=bytes_accessed)

    out = pl.pallas_call(
        kernel,
        out_shape=out_shape,
        grid_spec=grid_spec,
        compiler_params=pltpu.CompilerParams(
            dimension_semantics=("parallel",),   # batch blocks are independent
            vmem_limit_bytes=vmem_limit),
        cost_estimate=cost,
    )(shift_flat, x_in, ry_all, cxT_all)

    return out.reshape(n_pad, c, h, w)


def data_aug(x, shift, pad=PAD, max_block_b=32):
    """x: (N, C, H, W) float; shift: (N, 2) int32 in [0, 2*pad] as (sx, sy)."""
    global _LANE_DENSE_OK
    n, c, h, w = x.shape
    assert h == w  # mirrors the PyTorch module's assert (separable form would allow h != w)
    dtype = x.dtype
    item = jnp.dtype(dtype).itemsize
    hw = h * w

    # Generation-aware VMEM sizing: v5e/v6e have 128 MiB physical VMEM (use
    # bigger tiles), v7x has 64 MiB per core (stay conservative).
    try:
        vmem_phys = int(getattr(pltpu.get_tpu_info(), "vmem_capacity_bytes", 0))
    except Exception:
        vmem_phys = 0
    if vmem_phys >= 100 * 1024 * 1024:
        tile_budget, vmem_limit = 40 * 1024 * 1024, 80 * 1024 * 1024
    else:
        tile_budget, vmem_limit = 18 * 1024 * 1024, 40 * 1024 * 1024

    # Per-image VMEM footprint (worst of the two layouts, with (8,128) padding),
    # double-buffered input + output.
    padded_img = max(_round_up(c, 8) * _round_up(hw, 128),
                     c * _round_up(h, 8) * _round_up(w, 128)) * item
    b_cap = max(1, tile_budget // (4 * padded_img))
    b_cap = int(min(b_cap, max_block_b, n))
    if n > 1:
        # Keep >= 2 grid steps so v7x's two TensorCores can both take work.
        b_cap = min(b_cap, -(-n // 2))
    block_b = max(1, b_cap)

    # Pad the batch to a multiple of block_b (no divisor search); padded images
    # are processed with shift=0 and sliced off below.
    n_pad = _round_up(n, block_b)
    if n_pad != n:
        x = jnp.concatenate([x, jnp.zeros((n_pad - n, c, h, w), dtype)], axis=0)
        shift = jnp.concatenate(
            [shift, jnp.zeros((n_pad - n, 2), shift.dtype)], axis=0)
    # 1-D int32 for SMEM scalar prefetch (2-D [N,2] SMEM would pad heavily).
    shift_flat = shift.reshape(-1).astype(jnp.int32)

    # All 2*pad+1 possible selection matrices (exact 0/1 rows), built once.
    tab = _build_shift_tables(h, pad, dtype)            # (S, H, H)
    ry_all = tab                                        # rows:   (H_out, H_in)
    cxT_all = jnp.transpose(tab, (0, 2, 1))             # cols^T: (W_in, W_out)

    if _LANE_DENSE_OK:
        try:
            out = _data_aug_call(x, shift_flat, ry_all, cxT_all,
                                 block_b=block_b, lane_dense=True,
                                 vmem_limit=vmem_limit)
            return jax.block_until_ready(out)[:n]
        except Exception:
            # In-kernel relayout across the lane boundary not supported by this
            # Mosaic version -> fall back to the (N, C, H, W) block layout.
            _LANE_DENSE_OK = False
    out = _data_aug_call(x, shift_flat, ry_all, cxT_all,
                         block_b=block_b, lane_dense=False,
                         vmem_limit=vmem_limit)
    return out[:n]


def _reference(x, shift, pad=PAD):
    # Pure-JAX reference: integer shifts => grid_sample reduces to an exact
    # shifted crop of the replicate-padded image.
    n, c, h, w = x.shape
    sx = shift[:, 0]
    sy = shift[:, 1]
    rows = jnp.clip(jnp.arange(h)[None, :] + sy[:, None] - pad, 0, h - 1)  # (n,h)
    cols = jnp.clip(jnp.arange(w)[None, :] + sx[:, None] - pad, 0, w - 1)  # (n,w)
    return x[jnp.arange(n)[:, None, None, None],
             jnp.arange(c)[None, :, None, None],
             rows[:, None, :, None],
             cols[:, None, None, :]]


if __name__ == "__main__":
    key = jax.random.PRNGKey(0)
    kx, ks = jax.random.split(key)
    n, c, h, w = 2, 4, 16, 16
    x = jax.random.normal(kx, (n, c, h, w), dtype=jnp.float32)
    # torch.randint(0, 2*pad+1, (n,1,1,2)) -> per-image (sx, sy) integer shifts.
    # TODO(synk): the torch module draws these internally; here they come from
    # jax.random and are passed in explicitly (RNG streams necessarily differ).
    shift = jax.random.randint(ks, (n, 2), 0, 2 * PAD + 1, dtype=jnp.int32)

    out = data_aug(x, shift)
    out = jax.block_until_ready(out)

    ref = _reference(x, shift)
    assert out.shape == (n, c, h, w)
    assert jnp.allclose(out, ref, atol=1e-5), "mismatch vs reference"
    print("KERNEL_OK")
</pallas_src>

<mosaic_0001>
module attributes {stable_mosaic.version = 11 : i64} {
  func.func @_shift_aug_kernel(%arg0: i32, %arg1: memref<4xi32, #tpu.memory_space<smem>>, %arg2: memref<1x4x256xf32, #tpu.memory_space<vmem>>, %arg3: memref<9x16x16xf32, #tpu.memory_space<vmem>>, %arg4: memref<9x16x16xf32, #tpu.memory_space<vmem>>, %arg5: memref<1x4x256xf32, #tpu.memory_space<vmem>>) attributes {dimension_semantics = [#tpu.dimension_semantics<parallel>], iteration_bounds = array<i64: 2>, scalar_prefetch = 1 : i64, scratch_operands = 0 : i64, tpu.core_type = #tpu.core_type<tc>, window_params = [{transform_indices = @transform_0, window_bounds = array<i64: 1, 4, 256>}, {pipeline_mode = #tpu.pipeline_mode<synchronous>, transform_indices = @transform_1, window_bounds = array<i64: 9, 16, 16>}, {pipeline_mode = #tpu.pipeline_mode<synchronous>, transform_indices = @transform_2, window_bounds = array<i64: 9, 16, 16>}, {transform_indices = @transform_3, window_bounds = array<i64: 1, 4, 256>}]} {
    %c0_i32 = arith.constant 0 : i32
    %c1_i32 = arith.constant 1 : i32
    %0 = arith.muli %arg0, %c1_i32 : i32
    %1 = arith.addi %0, %c0_i32 : i32
    %c2_i32 = arith.constant 2 : i32
    %2 = arith.muli %c2_i32, %1 : i32
    %3 = arith.index_cast %2 : i32 to index
    %4 = memref.load %arg1[%3] : memref<4xi32, #tpu.memory_space<smem>>
    %c2_i32_0 = arith.constant 2 : i32
    %5 = arith.muli %c2_i32_0, %1 : i32
    %c1_i32_1 = arith.constant 1 : i32
    %6 = arith.addi %5, %c1_i32_1 : i32
    %7 = arith.index_cast %6 : i32 to index
    %8 = memref.load %arg1[%7] : memref<4xi32, #tpu.memory_space<smem>>
    %9 = arith.index_cast %8 : i32 to index
    %c0 = arith.constant 0 : index
    %c0_2 = arith.constant 0 : index
    %10 = vector.load %arg3[%9, %c0, %c0_2] : memref<9x16x16xf32, #tpu.memory_space<vmem>>, vector<1x16x16xf32>
    %11 = vector.shape_cast %10 : vector<1x16x16xf32> to vector<16x16xf32>
    %12 = arith.index_cast %4 : i32 to index
    %c0_3 = arith.constant 0 : index
    %c0_4 = arith.constant 0 : index
    %13 = vector.load %arg4[%12, %c0_3, %c0_4] : memref<9x16x16xf32, #tpu.memory_space<vmem>>, vector<1x16x16xf32>
    %14 = vector.shape_cast %13 : vector<1x16x16xf32> to vector<16x16xf32>
    %15 = arith.index_cast %c0_i32 : i32 to index
    %c0_5 = arith.constant 0 : index
    %c0_6 = arith.constant 0 : index
    %16 = vector.load %arg2[%15, %c0_5, %c0_6] : memref<1x4x256xf32, #tpu.memory_space<vmem>>, vector<1x4x256xf32>
    %17 = vector.shape_cast %16 : vector<1x4x256xf32> to vector<4x256xf32>
    %18 = vector.shape_cast %17 : vector<4x256xf32> to vector<64x16xf32>
    %cst = arith.constant dense<0.000000e+00> : vector<64x16xf32>
    %19 = tpu.matmul %18, %14, %cst {dimension_numbers = #tpu.dot_dimension_numbers<[1], [0], [0], [1], [0, 0, 1, 1], [], []>} : vector<64x16xf32>, vector<16x16xf32>, vector<64x16xf32> -> vector<64x16xf32>
    %20 = vector.extract_strided_slice %19 {offsets = [0, 0], sizes = [16, 16], strides = [1, 1]} : vector<64x16xf32> to vector<16x16xf32>
    %cst_7 = arith.constant dense<0.000000e+00> : vector<16x16xf32>
    %21 = tpu.matmul %11, %20, %cst_7 {dimension_numbers = #tpu.dot_dimension_numbers<[1], [0], [0], [1], [0, 0, 1, 1], [], []>} : vector<16x16xf32>, vector<16x16xf32>, vector<16x16xf32> -> vector<16x16xf32>
    %22 = vector.shape_cast %21 : vector<16x16xf32> to vector<1x256xf32>
    %23 = vector.extract_strided_slice %19 {offsets = [16, 0], sizes = [16, 16], strides = [1, 1]} : vector<64x16xf32> to vector<16x16xf32>
    %cst_8 = arith.constant dense<0.000000e+00> : vector<16x16xf32>
    %24 = tpu.matmul %11, %23, %cst_8 {dimension_numbers = #tpu.dot_dimension_numbers<[1], [0], [0], [1], [0, 0, 1, 1], [], []>} : vector<16x16xf32>, vector<16x16xf32>, vector<16x16xf32> -> vector<16x16xf32>
    %25 = vector.shape_cast %24 : vector<16x16xf32> to vector<1x256xf32>
    %26 = vector.extract_strided_slice %19 {offsets = [32, 0], sizes = [16, 16], strides = [1, 1]} : vector<64x16xf32> to vector<16x16xf32>
    %cst_9 = arith.constant dense<0.000000e+00> : vector<16x16xf32>
    %27 = tpu.matmul %11, %26, %cst_9 {dimension_numbers = #tpu.dot_dimension_numbers<[1], [0], [0], [1], [0, 0, 1, 1], [], []>} : vector<16x16xf32>, vector<16x16xf32>, vector<16x16xf32> -> vector<16x16xf32>
    %28 = vector.shape_cast %27 : vector<16x16xf32> to vector<1x256xf32>
    %29 = vector.extract_strided_slice %19 {offsets = [48, 0], sizes = [16, 16], strides = [1, 1]} : vector<64x16xf32> to vector<16x16xf32>
    %cst_10 = arith.constant dense<0.000000e+00> : vector<16x16xf32>
    %30 = tpu.matmul %11, %29, %cst_10 {dimension_numbers = #tpu.dot_dimension_numbers<[1], [0], [0], [1], [0, 0, 1, 1], [], []>} : vector<16x16xf32>, vector<16x16xf32>, vector<16x16xf32> -> vector<16x16xf32>
    %31 = vector.shape_cast %30 : vector<16x16xf32> to vector<1x256xf32>
    %32 = tpu.concatenate %22, %25, %28, %31 in 0 : vector<1x256xf32>, vector<1x256xf32>, vector<1x256xf32>, vector<1x256xf32> -> vector<4x256xf32>
    %33 = arith.index_cast %c0_i32 : i32 to index
    %c0_11 = arith.constant 0 : index
    %c0_12 = arith.constant 0 : index
    %34 = vector.load %arg5[%33, %c0_11, %c0_12] : memref<1x4x256xf32, #tpu.memory_space<vmem>>, vector<1x4x256xf32>
    %35 = vector.shape_cast %34 : vector<1x4x256xf32> to vector<4x256xf32>
    %36 = vector.shape_cast %32 : vector<4x256xf32> to vector<1x4x256xf32>
    tpu.vector_store %arg5[%33, %c0_11, %c0_12], %36 {strides = array<i32>} : memref<1x4x256xf32, #tpu.memory_space<vmem>>, vector<1x4x256xf32>,
    %c1_i32_13 = arith.constant 1 : i32
    return
  }
  func.func @transform_0(%arg0: i32, %arg1: memref<4xi32, #tpu.memory_space<smem>>) -> (i32, i32, i32) {
    %c0_i32 = arith.constant 0 : i32
    %c0_i32_0 = arith.constant 0 : i32
    %c0_i32_1 = arith.constant 0 : i32
    return %arg0, %c0_i32, %c0_i32_0 : i32, i32, i32
  }
  func.func @transform_1(%arg0: i32, %arg1: memref<4xi32, #tpu.memory_space<smem>>) -> (i32, i32, i32) {
    %c0_i32 = arith.constant 0 : i32
    %c0_i32_0 = arith.constant 0 : i32
    %c0_i32_1 = arith.constant 0 : i32
    %c0_i32_2 = arith.constant 0 : i32
    return %c0_i32, %c0_i32_0, %c0_i32_1 : i32, i32, i32
  }
  func.func @transform_2(%arg0: i32, %arg1: memref<4xi32, #tpu.memory_space<smem>>) -> (i32, i32, i32) {
    %c0_i32 = arith.constant 0 : i32
    %c0_i32_0 = arith.constant 0 : i32
    %c0_i32_1 = arith.constant 0 : i32
    %c0_i32_2 = arith.constant 0 : i32
    return %c0_i32, %c0_i32_0, %c0_i32_1 : i32, i32, i32
  }
  func.func @transform_3(%arg0: i32, %arg1: memref<4xi32, #tpu.memory_space<smem>>) -> (i32, i32, i32) {
    %c0_i32 = arith.constant 0 : i32
    %c0_i32_0 = arith.constant 0 : i32
    %c0_i32_1 = arith.constant 0 : i32
    return %arg0, %c0_i32, %c0_i32_0 : i32, i32, i32
  }
}

module attributes {stable_mosaic.version = 11 : i64} {
  func.func @_shift_aug_kernel(%arg0: i32, %arg1: memref<4xi32, #tpu.memory_space<smem>>, %arg2: memref<1x4x16x16xf32, #tpu.memory_space<vmem>>, %arg3: memref<9x16x16xf32, #tpu.memory_space<vmem>>, %arg4: memref<9x16x16xf32, #tpu.memory_space<vmem>>, %arg5: memref<1x4x16x16xf32, #tpu.memory_space<vmem>>) attributes {dimension_semantics = [#tpu.dimension_semantics<parallel>], iteration_bounds = array<i64: 2>, scalar_prefetch = 1 : i64, scratch_operands = 0 : i64, tpu.core_type = #tpu.core_type<tc>, window_params = [{transform_indices = @transform_0, window_bounds = array<i64: 1, 4, 16, 16>}, {pipeline_mode = #tpu.pipeline_mode<synchronous>, transform_indices = @transform_1, window_bounds = array<i64: 9, 16, 16>}, {pipeline_mode = #tpu.pipeline_mode<synchronous>, transform_indices = @transform_2, window_bounds = array<i64: 9, 16, 16>}, {transform_indices = @transform_3, window_bounds = array<i64: 1, 4, 16, 16>}]} {
    %c0_i32 = arith.constant 0 : i32
    %c1_i32 = arith.constant 1 : i32
    %0 = arith.muli %arg0, %c1_i32 : i32
    %1 = arith.addi %0, %c0_i32 : i32
    %c2_i32 = arith.constant 2 : i32
    %2 = arith.muli %c2_i32, %1 : i32
    %3 = arith.index_cast %2 : i32 to index
    %4 = memref.load %arg1[%3] : memref<4xi32, #tpu.memory_space<smem>>
    %c2_i32_0 = arith.constant 2 : i32
    %5 = arith.muli %c2_i32_0, %1 : i32
    %c1_i32_1 = arith.constant 1 : i32
    %6 = arith.addi %5, %c1_i32_1 : i32
    %7 = arith.index_cast %6 : i32 to index
    %8 = memref.load %arg1[%7] : memref<4xi32, #tpu.memory_space<smem>>
    %9 = arith.index_cast %8 : i32 to index
    %c0 = arith.constant 0 : index
    %c0_2 = arith.constant 0 : index
    %10 = vector.load %arg3[%9, %c0, %c0_2] : memref<9x16x16xf32, #tpu.memory_space<vmem>>, vector<1x16x16xf32>
    %11 = vector.shape_cast %10 : vector<1x16x16xf32> to vector<16x16xf32>
    %12 = arith.index_cast %4 : i32 to index
    %c0_3 = arith.constant 0 : index
    %c0_4 = arith.constant 0 : index
    %13 = vector.load %arg4[%12, %c0_3, %c0_4] : memref<9x16x16xf32, #tpu.memory_space<vmem>>, vector<1x16x16xf32>
    %14 = vector.shape_cast %13 : vector<1x16x16xf32> to vector<16x16xf32>
    %15 = arith.index_cast %c0_i32 : i32 to index
    %c0_5 = arith.constant 0 : index
    %c0_6 = arith.constant 0 : index
    %c0_7 = arith.constant 0 : index
    %16 = vector.load %arg2[%15, %c0_5, %c0_6, %c0_7] : memref<1x4x16x16xf32, #tpu.memory_space<vmem>>, vector<1x4x16x16xf32>
    %17 = vector.shape_cast %16 : vector<1x4x16x16xf32> to vector<4x16x16xf32>
    %18 = vector.shape_cast %17 : vector<4x16x16xf32> to vector<64x16xf32>
    %cst = arith.constant dense<0.000000e+00> : vector<64x16xf32>
    %19 = tpu.matmul %18, %14, %cst {dimension_numbers = #tpu.dot_dimension_numbers<[1], [0], [0], [1], [0, 0, 1, 1], [], []>} : vector<64x16xf32>, vector<16x16xf32>, vector<64x16xf32> -> vector<64x16xf32>
    %20 = vector.extract_strided_slice %19 {offsets = [0, 0], sizes = [16, 16], strides = [1, 1]} : vector<64x16xf32> to vector<16x16xf32>
    %cst_8 = arith.constant dense<0.000000e+00> : vector<16x16xf32>
    %21 = tpu.matmul %11, %20, %cst_8 {dimension_numbers = #tpu.dot_dimension_numbers<[1], [0], [0], [1], [0, 0, 1, 1], [], []>} : vector<16x16xf32>, vector<16x16xf32>, vector<16x16xf32> -> vector<16x16xf32>
    %22 = vector.shape_cast %21 : vector<16x16xf32> to vector<1x16x16xf32>
    %23 = vector.extract_strided_slice %19 {offsets = [16, 0], sizes = [16, 16], strides = [1, 1]} : vector<64x16xf32> to vector<16x16xf32>
    %cst_9 = arith.constant dense<0.000000e+00> : vector<16x16xf32>
    %24 = tpu.matmul %11, %23, %cst_9 {dimension_numbers = #tpu.dot_dimension_numbers<[1], [0], [0], [1], [0, 0, 1, 1], [], []>} : vector<16x16xf32>, vector<16x16xf32>, vector<16x16xf32> -> vector<16x16xf32>
    %25 = vector.shape_cast %24 : vector<16x16xf32> to vector<1x16x16xf32>
    %26 = vector.extract_strided_slice %19 {offsets = [32, 0], sizes = [16, 16], strides = [1, 1]} : vector<64x16xf32> to vector<16x16xf32>
    %cst_10 = arith.constant dense<0.000000e+00> : vector<16x16xf32>
    %27 = tpu.matmul %11, %26, %cst_10 {dimension_numbers = #tpu.dot_dimension_numbers<[1], [0], [0], [1], [0, 0, 1, 1], [], []>} : vector<16x16xf32>, vector<16x16xf32>, vector<16x16xf32> -> vector<16x16xf32>
    %28 = vector.shape_cast %27 : vector<16x16xf32> to vector<1x16x16xf32>
    %29 = vector.extract_strided_slice %19 {offsets = [48, 0], sizes = [16, 16], strides = [1, 1]} : vector<64x16xf32> to vector<16x16xf32>
    %cst_11 = arith.constant dense<0.000000e+00> : vector<16x16xf32>
    %30 = tpu.matmul %11, %29, %cst_11 {dimension_numbers = #tpu.dot_dimension_numbers<[1], [0], [0], [1], [0, 0, 1, 1], [], []>} : vector<16x16xf32>, vector<16x16xf32>, vector<16x16xf32> -> vector<16x16xf32>
    %31 = vector.shape_cast %30 : vector<16x16xf32> to vector<1x16x16xf32>
    %32 = tpu.concatenate %22, %25, %28, %31 in 0 : vector<1x16x16xf32>, vector<1x16x16xf32>, vector<1x16x16xf32>, vector<1x16x16xf32> -> vector<4x16x16xf32>
    %33 = arith.index_cast %c0_i32 : i32 to index
    %c0_12 = arith.constant 0 : index
    %c0_13 = arith.constant 0 : index
    %c0_14 = arith.constant 0 : index
    %34 = vector.load %arg5[%33, %c0_12, %c0_13, %c0_14] : memref<1x4x16x16xf32, #tpu.memory_space<vmem>>, vector<1x4x16x16xf32>
    %35 = vector.shape_cast %34 : vector<1x4x16x16xf32> to vector<4x16x16xf32>
    %36 = vector.shape_cast %32 : vector<4x16x16xf32> to vector<1x4x16x16xf32>
    tpu.vector_store %arg5[%33, %c0_12, %c0_13, %c0_14], %36 {strides = array<i32>} : memref<1x4x16x16xf32, #tpu.memory_space<vmem>>, vector<1x4x16x16xf32>,
    %c1_i32_15 = arith.constant 1 : i32
    return
  }
  func.func @transform_0(%arg0: i32, %arg1: memref<4xi32, #tpu.memory_space<smem>>) -> (i32, i32, i32, i32) {
    %c0_i32 = arith.constant 0 : i32
    %c0_i32_0 = arith.constant 0 : i32
    %c0_i32_1 = arith.constant 0 : i32
    %c0_i32_2 = arith.constant 0 : i32
    return %arg0, %c0_i32, %c0_i32_0, %c0_i32_1 : i32, i32, i32, i32
  }
  func.func @transform_1(%arg0: i32, %arg1: memref<4xi32, #tpu.memory_space<smem>>) -> (i32, i32, i32) {
    %c0_i32 = arith.constant 0 : i32
    %c0_i32_0 = arith.constant 0 : i32
    %c0_i32_1 = arith.constant 0 : i32
    %c0_i32_2 = arith.constant 0 : i32
    return %c0_i32, %c0_i32_0, %c0_i32_1 : i32, i32, i32
  }
  func.func @transform_2(%arg0: i32, %arg1: memref<4xi32, #tpu.memory_space<smem>>) -> (i32, i32, i32) {
    %c0_i32 = arith.constant 0 : i32
    %c0_i32_0 = arith.constant 0 : i32
    %c0_i32_1 = arith.constant 0 : i32
    %c0_i32_2 = arith.constant 0 : i32
    return %c0_i32, %c0_i32_0, %c0_i32_1 : i32, i32, i32
  }
  func.func @transform_3(%arg0: i32, %arg1: memref<4xi32, #tpu.memory_space<smem>>) -> (i32, i32, i32, i32) {
    %c0_i32 = arith.constant 0 : i32
    %c0_i32_0 = arith.constant 0 : i32
    %c0_i32_1 = arith.constant 0 : i32
    %c0_i32_2 = arith.constant 0 : i32
    return %arg0, %c0_i32, %c0_i32_0, %c0_i32_1 : i32, i32, i32, i32
  }
}

</mosaic_0001>

<llo_original>
// kernel: tpu_custom_call.1
$region0: #{tpu_custom_call.1}
  #allocation0 [shape = 'u32[]', space=smem, size = 0x4, offset = 0x4, fixed_abs, tag = 'smem constant byte address 0x4 - core index']
  #allocation1 [shape = 'u32[72,128]{1,0:T(1,128)}', space=vmem, size = 0x9000, scoped, tag = 'internal scratch']
  #allocation2 [shape = 's32[1]{0}', space=sflag, size = 0x4, scoped, tag = 'scoped memory for tpu_custom_call.1']
  #allocation3 [shape = 'u8[512]{0}', space=smem, size = 0x200, scoped, tag = 'prefetched SMEM operand 0']
  %s0 = inlined_call_operand.hbm [shape: s32[4], index: 0, kind: input, shape index: {}]
  %s1 = inlined_call_operand.hbm [shape: f32[2,4,16,16], index: 1, kind: input, shape index: {}]
  %s2 = inlined_call_operand.hbm [shape: f32[9,16,16], index: 2, kind: input, shape index: {}]
  %s3 = inlined_call_operand.hbm [shape: f32[9,16,16], index: 3, kind: input, shape index: {}]
  %s4 = inlined_call_operand.hbm [shape: f32[2,4,16,16], index: 4, kind: output, shape index: {}]
  %s5 = sld [smem:[#allocation0]]
  $region57: #{tpu_custom_call.1} parent=0
    _
  %s7 = ssub.s32 1, %s5
  %s8 = scalar_select 0, %s7, %s5
  %s10 = sshll.u32 %s0, 4
  %s11 = int_to_ptr.hbm [resolvable:$true] %s10
  %13 = dma.hbm_to_smem %s11, 16, [#allocation3], [#allocation2]
  %15 = dma.done [#allocation2], 16
  %16 = sfence
  $region1: #{tpu_custom_call.1} parent=0
    #allocation4 [shape = 'u8[65536]{0}', space=vmem, size = 0x10000, scoped, tag = 'input window, operand 1']
    #allocation5 [shape = 's32[2]{0}', space=sflag, size = 0x8, scoped, tag = 'scoped memory for tpu_custom_call.1']
    #allocation6 [shape = 's32[2]{0}', space=sflag, size = 0x8, scoped, tag = 'scoped memory for tpu_custom_call.1']
    #allocation7 [shape = 'u8[73728]{0}', space=vmem, size = 0x12000, scoped, tag = 'input window, operand 2, single buffered']
    #allocation8 [shape = 's32[1]{0}', space=sflag, size = 0x4, scoped, tag = 'scoped memory for tpu_custom_call.1']
    #allocation9 [shape = 'u8[73728]{0}', space=vmem, size = 0x12000, scoped, tag = 'input window, operand 3, single buffered']
    #allocation10 [shape = 'u8[65536]{0}', space=vmem, size = 0x10000, scoped, tag = 'output window, operand 0']
    %17 = vsyncpa [#allocation5], 0
    %s18 = scalar_lea.sflag [#allocation5], 1
    %19 = vsyncpa %s18, 0
    %20 = vsyncpa [#allocation8], 0
    %21 = vsyncpa [#allocation6], 0
    %s22 = scalar_lea.sflag [#allocation6], 1
    %23 = vsyncpa %s22, 0
    loop: start=0, step=1, limit=4
    $region2: #{tpu_custom_call.1} parent=1 // loop_pre_header
      _
    $region3: #{tpu_custom_call.1} parent=1 // loop_header
      %s25 = sphi 0, %s29
      %p26 = scmp.ge.s32.totalorder %s25, 4
      %s35 = sphi 0, %s37
      %s38 = sphi 0, %s35
      %s39 = sphi 0, %s38
      %s55 = sphi 0, %s39
      %s59 = sphi 0, %s59
      %s61 = sphi 0, %s59
      %s62 = sphi 0, %s61
      %s76 = sphi 0, %s62
      %s80 = sphi 0, %s80
      %s82 = sphi 0, %s80
      %s83 = sphi 0, %s82
      %s97 = sphi 0, %s83
      %s103 = sphi 0, %s105
      %s106 = sphi 0, %s103
      %s107 = sphi 0, %s106
      %s123 = sphi 0, %s107
    $region4: #{tpu_custom_call.1} parent=1 // loop_header_branch
      %28 = sbr.rel (%p26) target = $region8
    $region5: #{tpu_custom_call.1} parent=1 // loop_body
      %s30 = ssub.s32 %s25, 1
      %s31 = ssub.s32 %s25, 2
      %s32 = sadd.s32 %s25, 1
      %s33 = ssub.s32 %s25, %s32
      %p34 = scmp.eq.s32.totalorder %s33, 0
      %s36 = sadd.s32 %s35, 1
      %s37 = scalar_select %p34, %s35, %s36
      %p40 = pneg %p34
      %p41 = scmp.eq.s32.totalorder %s25, 1
      %p42 = por %p40, %p41
      %p43 = scmp.ne.s32.totalorder %s35, %s38
      %p44 = scmp.eq.s32.totalorder %s25, 0
      %p45 = por %p43, %p44
      %p46 = scmp.ne.s32.totalorder %s35, %s38
      %p47 = scmp.eq.s32.totalorder %s30, 1
      %p48 = por %p46, %p47
      %p49 = scmp.ne.s32.totalorder %s38, %s39
      %p50 = scmp.eq.s32.totalorder %s30, 0
      %p51 = por %p49, %p50
      %p52 = scmp.ne.s32.totalorder %s38, %s39
      %p53 = scmp.eq.s32.totalorder %s31, 1
      %p54 = por %p52, %p53
      %p56 = scmp.ne.s32.totalorder %s39, %s55
      %p57 = scmp.eq.s32.totalorder %s31, 0
      %p58 = por %p56, %p57
      %s60 = sadd.s32 %s59, 1
      %p63 = scmp.eq.s32.totalorder %s25, 1
      %p64 = scmp.ne.s32.totalorder %s59, %s61
      %p65 = scmp.eq.s32.totalorder %s25, 0
      %p66 = por %p64, %p65
      %p67 = scmp.ne.s32.totalorder %s59, %s61
      %p68 = scmp.eq.s32.totalorder %s30, 1
      %p69 = por %p67, %p68
      %p70 = scmp.ne.s32.totalorder %s61, %s62
      %p71 = scmp.eq.s32.totalorder %s30, 0
      %p72 = por %p70, %p71
      %p73 = scmp.ne.s32.totalorder %s61, %s62
      %p74 = scmp.eq.s32.totalorder %s31, 1
      %p75 = por %p73, %p74
      %p77 = scmp.ne.s32.totalorder %s62, %s76
      %p78 = scmp.eq.s32.totalorder %s31, 0
      %p79 = por %p77, %p78
      %s81 = sadd.s32 %s80, 1
      %p84 = scmp.eq.s32.totalorder %s25, 1
      %p85 = scmp.ne.s32.totalorder %s80, %s82
      %p86 = scmp.eq.s32.totalorder %s25, 0
      %p87 = por %p85, %p86
      %p88 = scmp.ne.s32.totalorder %s80, %s82
      %p89 = scmp.eq.s32.totalorder %s30, 1
      %p90 = por %p88, %p89
      %p91 = scmp.ne.s32.totalorder %s82, %s83
      %p92 = scmp.eq.s32.totalorder %s30, 0
      %p93 = por %p91, %p92
      %p94 = scmp.ne.s32.totalorder %s82, %s83
      %p95 = scmp.eq.s32.totalorder %s31, 1
      %p96 = por %p94, %p95
      %p98 = scmp.ne.s32.totalorder %s83, %s97
      %p99 = scmp.eq.s32.totalorder %s31, 0
      %p100 = por %p98, %p99
      %s101 = ssub.s32 %s25, %s32
      %p102 = scmp.eq.s32.totalorder %s101, 0
      %s104 = sadd.s32 %s103, 1
      %s105 = scalar_select %p102, %s103, %s104
      %p108 = pneg %p102
      %p109 = scmp.eq.s32.totalorder %s25, 1
      %p110 = por %p108, %p109
      %p111 = scmp.ne.s32.totalorder %s103, %s106
      %p112 = scmp.eq.s32.totalorder %s25, 0
      %p113 = por %p111, %p112
      %p114 = scmp.ne.s32.totalorder %s103, %s106
      %p115 = scmp.eq.s32.totalorder %s30, 1
      %p116 = por %p114, %p115
      %p117 = scmp.ne.s32.totalorder %s106, %s107
      %p118 = scmp.eq.s32.totalorder %s30, 0
      %p119 = por %p117, %p118
      %p120 = scmp.ne.s32.totalorder %s106, %s107
      %p121 = scmp.eq.s32.totalorder %s31, 1
      %p122 = por %p120, %p121
      %p124 = scmp.ne.s32.totalorder %s107, %s123
      %p125 = scmp.eq.s32.totalorder %s31, 0
      %p126 = por %p124, %p125
      %p127 = scmp.le.s32.totalorder 1, %s25
      %p128 = scmp.lt.s32.totalorder %s25, 3
      %p129 = pnand %p127, %p128
      %p130 = pneg %p129
      // Predicated region
      $region9: #{tpu_custom_call.1} parent=5 // pred_check
        _
      $region10: #{tpu_custom_call.1} parent=5 // pred_check_branch
        %132 = sbr.rel (%p129) target = $region12
      $region11: #{tpu_custom_call.1} parent=5 // pred_region
        %s133 = ssub.s32 %s25, 1
        // Predicated region
        $region13: #{tpu_custom_call.1} parent=11 // pred_check
          %p134 = pneg %p72
        $region14: #{tpu_custom_call.1} parent=11 // pred_check_branch
          %136 = sbr.rel (%p134) target = $region16
        $region15: #{tpu_custom_call.1} parent=11 // pred_region
          %138 = vsyncadd [#allocation8], 0
          %s139 = sshll.u32 %s2, 4
          %s140 = int_to_ptr.hbm [resolvable:$true] %s139
          %s141 = sshll.u32 [#allocation7], 4
          %s142 = int_to_ptr.vmem [resolvable:$true] %s141
          %147 = dma.hbm_to_vmem [thread:$0]  %s140, 2304, %s142, [#allocation8], 128, 128, 8
        $region16: #{tpu_custom_call.1} parent=11 // pred_fallthru
          _
        // Predicated region
        $region17: #{tpu_custom_call.1} parent=11 // pred_check
          %p148 = pneg %p93
        $region18: #{tpu_custom_call.1} parent=11 // pred_check_branch
          %150 = sbr.rel (%p148) target = $region20
        $region19: #{tpu_custom_call.1} parent=11 // pred_region
          %152 = vsyncadd [#allocation8], 0
          %s153 = sshll.u32 %s3, 4
          %s154 = int_to_ptr.hbm [resolvable:$true] %s153
          %s155 = sshll.u32 [#allocation9], 4
          %s156 = int_to_ptr.vmem [resolvable:$true] %s155
          %161 = dma.hbm_to_vmem [thread:$0]  %s154, 2304, %s156, [#allocation8], 128, 128, 8
        $region20: #{tpu_custom_call.1} parent=11 // pred_fallthru
          _
      $region12: #{tpu_custom_call.1} parent=5 // pred_fallthru
        _
      %p162 = scmp.lt.s32.totalorder %s25, 2
      // Predicated region
      $region21: #{tpu_custom_call.1} parent=5 // pred_check
        %p163 = pneg %p162
      $region22: #{tpu_custom_call.1} parent=5 // pred_check_branch
        %165 = sbr.rel (%p163) target = $region24
      $region23: #{tpu_custom_call.1} parent=5 // pred_region
        // Predicated region
        $region25: #{tpu_custom_call.1} parent=23 // pred_check
          %p166 = pneg %p45
        $region26: #{tpu_custom_call.1} parent=23 // pred_check_branch
          %168 = sbr.rel (%p166) target = $region28
        $region27: #{tpu_custom_call.1} parent=23 // pred_region
          %s169 = sand.u32 %s35, 1
          %s170 = scalar_lea.sflag [#allocation5], %s169
          %s171 = sand.u32 %s35, 1
          %s172 = smul.addr %s171, 64
          %s173 = scalar_lea.vmem [#allocation4], %s172
          %175 = vsyncadd %s170, 0
          %s176 = smul.addr %s25, 8
          %s177 = smul.addr %s176, 8
          %s178 = scalar_lea.hbm %s1, %s177
          %s179 = sshll.u32 %s178, 4
          %s180 = int_to_ptr.hbm [resolvable:$true] %s179
          %s181 = sshll.u32 %s173, 4
          %s182 = int_to_ptr.vmem [resolvable:$true] %s181
          %187 = dma.hbm_to_vmem [thread:$0]  %s180, 1024, %s182, %s170, 128, 128, 8
        $region28: #{tpu_custom_call.1} parent=23 // pred_fallthru
          _
      $region24: #{tpu_custom_call.1} parent=5 // pred_fallthru
        _
      %p188 = scmp.le.s32.totalorder 1, %s25
      %p189 = scmp.lt.s32.totalorder %s25, 3
      %p190 = pnand %p188, %p189
      %p191 = pneg %p190
      // Predicated region
      $region29: #{tpu_custom_call.1} parent=5 // pred_check
        _
      $region30: #{tpu_custom_call.1} parent=5 // pred_check_branch
        %193 = sbr.rel (%p190) target = $region32
      $region31: #{tpu_custom_call.1} parent=5 // pred_region
        %s194 = ssub.s32 %s25, 1
        %s195 = sand.u32 %s38, 1
        %s196 = scalar_lea.sflag [#allocation5], %s195
        %s197 = sand.u32 %s38, 1
        %s198 = smul.addr %s197, 64
        %s199 = scalar_lea.vmem [#allocation4], %s198
        // Predicated region
        $region33: #{tpu_custom_call.1} parent=31 // pred_check
          %p200 = pneg %p51
        $region34: #{tpu_custom_call.1} parent=31 // pred_check_branch
          %202 = sbr.rel (%p200) target = $region36
        $region35: #{tpu_custom_call.1} parent=31 // pred_region
          %204 = dma.done %s196, 1024
        $region36: #{tpu_custom_call.1} parent=31 // pred_fallthru
          _
        // Predicated region
        $region37: #{tpu_custom_call.1} parent=31 // pred_check
          %p205 = pneg %p72
        $region38: #{tpu_custom_call.1} parent=31 // pred_check_branch
          %207 = sbr.rel (%p205) target = $region40
        $region39: #{tpu_custom_call.1} parent=31 // pred_region
          %209 = dma.done [#allocation8], 2304
        $region40: #{tpu_custom_call.1} parent=31 // pred_fallthru
          _
        // Predicated region
        $region41: #{tpu_custom_call.1} parent=31 // pred_check
          %p210 = pneg %p93
        $region42: #{tpu_custom_call.1} parent=31 // pred_check_branch
          %212 = sbr.rel (%p210) target = $region44
        $region43: #{tpu_custom_call.1} parent=31 // pred_region
          %214 = dma.done [#allocation8], 2304
        $region44: #{tpu_custom_call.1} parent=31 // pred_fallthru
          _
        %s215 = sand.u32 %s38, 1
        %s216 = scalar_lea.sflag [#allocation5], %s215
        %s217 = sand.u32 %s38, 1
        %s218 = smul.addr %s217, 64
        %s219 = scalar_lea.vmem [#allocation4], %s218
        %p220 = pneg %p51
        %p221 = pneg %p48
        %p222 = pneg %p72
        %p223 = pneg %p69
        %p224 = pneg %p93
        %p225 = pneg %p90
        %p226 = pneg %p119
        %p227 = pneg %p116
        %s228 = sand.u32 %s106, 1
        %s229 = scalar_lea.sflag [#allocation6], %s228
        %s230 = sand.u32 %s106, 1
        %s231 = smul.addr %s230, 64
        %s232 = scalar_lea.vmem [#allocation10], %s231
        %s233 = smul.u32 %s30, 2
        %s234 = sld [smem:[#allocation3 + %s233]]
        %s235 = sadd.s32 %s233, 1
        %s236 = sld [smem:[#allocation3 + %s235]]
        %s237 = smul.u32 %s236, 16
        %s238 = scalar_lea.vmem [#allocation7], %s237
        %v239 = vld [vmem:[%s238] sm:$0xff]
        %v240 = vld [vmem:[%s238 + $0x8] sm:$0xff]
        %s241 = smul.u32 %s234, 16
        %s242 = scalar_lea.vmem [#allocation9], %s241
        %v243 = vld [vmem:[%s242] sm:$0xff]
        %v244 = vld [vmem:[%s242 + $0x8] sm:$0xff]
        %v245 = vld [vmem:[%s199] sm:$0xff]
        %v246 = vld [vmem:[%s199 + $0x8] sm:$0xff]
        %v247 = vld [vmem:[%s199 + $0x10] sm:$0xff]
        %v248 = vld [vmem:[%s199 + $0x18] sm:$0xff]
        %v249 = vld [vmem:[%s199 + $0x20] sm:$0xff]
        %v250 = vld [vmem:[%s199 + $0x28] sm:$0xff]
        %v251 = vld [vmem:[%s199 + $0x30] sm:$0xff]
        %v252 = vld [vmem:[%s199 + $0x38] sm:$0xff]
        %vm253 = vcmask 130048
        %v255 = vsel %vm253, %v245, 0
        %v258 = vsel %vm253, %v246, 0
        %v261 = vsel %vm253, %v247, 0
        %v264 = vsel %vm253, %v248, 0
        %v267 = vsel %vm253, %v249, 0
        %v270 = vsel %vm253, %v250, 0
        %v273 = vsel %vm253, %v251, 0
        %v276 = vsel %vm253, %v252, 0
        %278 = vmatpush.msra.mxu0 0.0
        %279 = vmatpush.msra.mxu0 0.0
        %280 = vmatpush.msra.mxu0 0.0
        %281 = vmatpush.msra.mxu0 0.0
        %282 = vmatpush.msra.mxu0 0.0
        %283 = vmatpush.msra.mxu0 0.0
        %284 = vmatpush.msra.mxu0 0.0
        %285 = vmatpush.msra.mxu0 0.0
        %286 = vmatpush.msra.mxu0 0.0
        %287 = vmatpush.msra.mxu0 0.0
        %288 = vmatpush.msra.mxu0 0.0
        %289 = vmatpush.msra.mxu0 0.0
        %290 = vmatpush.msra.mxu0 0.0
        %291 = vmatpush.msra.mxu0 0.0
        %292 = vmatpush.msra.mxu0 %v244
        %293 = vmatpush.msra.mxu0 %v243
        %294 = vmatmul.f32.gmra.mxu0 %v255
        %v295 = vpop.f32.mrf.mxu0
        %v296 = vadd.f32 0.0, %v295
        %297 = vmatmul.f32.gmra.mxu0 %v258
        %v298 = vpop.f32.mrf.mxu0
        %v299 = vadd.f32 0.0, %v298
        %300 = vmatmul.f32.gmra.mxu0 %v261
        %v301 = vpop.f32.mrf.mxu0
        %v302 = vadd.f32 0.0, %v301
        %303 = vmatmul.f32.gmra.mxu0 %v264
        %v304 = vpop.f32.mrf.mxu0
        %v305 = vadd.f32 0.0, %v304
        %306 = vmatmul.f32.gmra.mxu0 %v267
        %v307 = vpop.f32.mrf.mxu0
        %v308 = vadd.f32 0.0, %v307
        %309 = vmatmul.f32.gmra.mxu0 %v270
        %v310 = vpop.f32.mrf.mxu0
        %v311 = vadd.f32 0.0, %v310
        %312 = vmatmul.f32.gmra.mxu0 %v273
        %v313 = vpop.f32.mrf.mxu0
        %v314 = vadd.f32 0.0, %v313
        %315 = vmatmul.f32.gmra.mxu0 %v276
        %v316 = vpop.f32.mrf.mxu0
        %v317 = vadd.f32 0.0, %v316
        %318 = vdwg.mxu0
        %v320 = vsel %vm253, %v239, 0
        %v323 = vsel %vm253, %v240, 0
        %325 = vmatpush.msra.mxu0 0.0
        %326 = vmatpush.msra.mxu0 0.0
        %327 = vmatpush.msra.mxu0 0.0
        %328 = vmatpush.msra.mxu0 0.0
        %329 = vmatpush.msra.mxu0 0.0
        %330 = vmatpush.msra.mxu0 0.0
        %331 = vmatpush.msra.mxu0 0.0
        %332 = vmatpush.msra.mxu0 0.0
        %333 = vmatpush.msra.mxu0 0.0
        %334 = vmatpush.msra.mxu0 0.0
        %335 = vmatpush.msra.mxu0 0.0
        %336 = vmatpush.msra.mxu0 0.0
        %337 = vmatpush.msra.mxu0 0.0
        %338 = vmatpush.msra.mxu0 0.0
        %339 = vmatpush.msra.mxu0 %v299
        %340 = vmatpush.msra.mxu0 %v296
        %341 = vmatmul.f32.gmra.mxu0 %v320
        %v342 = vpop.f32.mrf.mxu0
        %v343 = vadd.f32 0.0, %v342
        %344 = vmatmul.f32.gmra.mxu0 %v323
        %v345 = vpop.f32.mrf.mxu0
        %v346 = vadd.f32 0.0, %v345
        %347 = vdwg.mxu0
        %348 = vmatpush.msra.mxu0 0.0
        %349 = vmatpush.msra.mxu0 0.0
        %350 = vmatpush.msra.mxu0 0.0
        %351 = vmatpush.msra.mxu0 0.0
        %352 = vmatpush.msra.mxu0 0.0
        %353 = vmatpush.msra.mxu0 0.0
        %354 = vmatpush.msra.mxu0 0.0
        %355 = vmatpush.msra.mxu0 0.0
        %356 = vmatpush.msra.mxu0 0.0
        %357 = vmatpush.msra.mxu0 0.0
        %358 = vmatpush.msra.mxu0 0.0
        %359 = vmatpush.msra.mxu0 0.0
        %360 = vmatpush.msra.mxu0 0.0
        %361 = vmatpush.msra.mxu0 0.0
        %362 = vmatpush.msra.mxu0 %v305
        %363 = vmatpush.msra.mxu0 %v302
        %364 = vmatmul.f32.gmra.mxu0 %v320
        %v365 = vpop.f32.mrf.mxu0
        %v366 = vadd.f32 0.0, %v365
        %367 = vmatmul.f32.gmra.mxu0 %v323
        %v368 = vpop.f32.mrf.mxu0
        %v369 = vadd.f32 0.0, %v368
        %370 = vdwg.mxu0
        %371 = vmatpush.msra.mxu0 0.0
        %372 = vmatpush.msra.mxu0 0.0
        %373 = vmatpush.msra.mxu0 0.0
        %374 = vmatpush.msra.mxu0 0.0
        %375 = vmatpush.msra.mxu0 0.0
        %376 = vmatpush.msra.mxu0 0.0
        %377 = vmatpush.msra.mxu0 0.0
        %378 = vmatpush.msra.mxu0 0.0
        %379 = vmatpush.msra.mxu0 0.0
        %380 = vmatpush.msra.mxu0 0.0
        %381 = vmatpush.msra.mxu0 0.0
        %382 = vmatpush.msra.mxu0 0.0
        %383 = vmatpush.msra.mxu0 0.0
        %384 = vmatpush.msra.mxu0 0.0
        %385 = vmatpush.msra.mxu0 %v311
        %386 = vmatpush.msra.mxu0 %v308
        %387 = vmatmul.f32.gmra.mxu0 %v320
        %v388 = vpop.f32.mrf.mxu0
        %v389 = vadd.f32 0.0, %v388
        %390 = vmatmul.f32.gmra.mxu0 %v323
        %v391 = vpop.f32.mrf.mxu0
        %v392 = vadd.f32 0.0, %v391
        %393 = vdwg.mxu0
        %394 = vmatpush.msra.mxu0 0.0
        %395 = vmatpush.msra.mxu0 0.0
        %396 = vmatpush.msra.mxu0 0.0
        %397 = vmatpush.msra.mxu0 0.0
        %398 = vmatpush.msra.mxu0 0.0
        %399 = vmatpush.msra.mxu0 0.0
        %400 = vmatpush.msra.mxu0 0.0
        %401 = vmatpush.msra.mxu0 0.0
        %402 = vmatpush.msra.mxu0 0.0
        %403 = vmatpush.msra.mxu0 0.0
        %404 = vmatpush.msra.mxu0 0.0
        %405 = vmatpush.msra.mxu0 0.0
        %406 = vmatpush.msra.mxu0 0.0
        %407 = vmatpush.msra.mxu0 0.0
        %408 = vmatpush.msra.mxu0 %v317
        %409 = vmatpush.msra.mxu0 %v314
        %410 = vmatmul.f32.gmra.mxu0 %v320
        %v411 = vpop.f32.mrf.mxu0
        %v412 = vadd.f32 0.0, %v411
        %413 = vmatmul.f32.gmra.mxu0 %v323
        %v414 = vpop.f32.mrf.mxu0
        %v415 = vadd.f32 0.0, %v414
        %416 = vdwg.mxu0
        %417 = vst.msk [vmem:[%s232] sm:$0xff] %vm253, %v343
        %418 = vst.msk [vmem:[%s232 + $0x8] sm:$0xff] %vm253, %v346
        %419 = vst.msk [vmem:[%s232 + $0x10] sm:$0xff] %vm253, %v366
        %420 = vst.msk [vmem:[%s232 + $0x18] sm:$0xff] %vm253, %v369
        %421 = vst.msk [vmem:[%s232 + $0x20] sm:$0xff] %vm253, %v389
        %422 = vst.msk [vmem:[%s232 + $0x28] sm:$0xff] %vm253, %v392
        %423 = vst.msk [vmem:[%s232 + $0x30] sm:$0xff] %vm253, %v412
        %424 = vst.msk [vmem:[%s232 + $0x38] sm:$0xff] %vm253, %v415
        %s425 = sand.u32 %s106, 1
        %s426 = scalar_lea.sflag [#allocation6], %s425
        %s427 = sand.u32 %s106, 1
        %s428 = smul.addr %s427, 64
        %s429 = scalar_lea.vmem [#allocation10], %s428
        // Predicated region
        $region45: #{tpu_custom_call.1} parent=31 // pred_check
          %p430 = pneg %p116
        $region46: #{tpu_custom_call.1} parent=31 // pred_check_branch
          %432 = sbr.rel (%p430) target = $region48
        $region47: #{tpu_custom_call.1} parent=31 // pred_region
          %434 = vsyncadd %s426, 0
          %s435 = smul.addr %s30, 8
          %s436 = smul.addr %s435, 8
          %s437 = scalar_lea.hbm %s4, %s436
          %s438 = sshll.u32 %s429, 4
          %s439 = int_to_ptr.vmem [resolvable:$true] %s438
          %s440 = sshll.u32 %s437, 4
          %s441 = int_to_ptr.hbm [resolvable:$true] %s440
          %446 = dma.vmem_to_hbm [thread:$0]  %s439, 1024, %s441, %s426, 128, 128, 8
        $region48: #{tpu_custom_call.1} parent=31 // pred_fallthru
          _
      $region32: #{tpu_custom_call.1} parent=5 // pred_fallthru
        _
      %p447 = scmp.le.s32.totalorder 2, %s25
      // Predicated region
      $region49: #{tpu_custom_call.1} parent=5 // pred_check
        %p448 = pneg %p447
      $region50: #{tpu_custom_call.1} parent=5 // pred_check_branch
        %450 = sbr.rel (%p448) target = $region52
      $region51: #{tpu_custom_call.1} parent=5 // pred_region
        %s451 = ssub.s32 %s25, 2
        // Predicated region
        $region53: #{tpu_custom_call.1} parent=51 // pred_check
          %p452 = pneg %p122
        $region54: #{tpu_custom_call.1} parent=51 // pred_check_branch
          %454 = sbr.rel (%p452) target = $region56
        $region55: #{tpu_custom_call.1} parent=51 // pred_region
          %s455 = sand.u32 %s107, 1
          %s456 = scalar_lea.sflag [#allocation6], %s455
          %s457 = sand.u32 %s107, 1
          %s458 = smul.addr %s457, 64
          %s459 = scalar_lea.vmem [#allocation10], %s458
          %461 = dma.done %s456, 1024
        $region56: #{tpu_custom_call.1} parent=51 // pred_fallthru
          _
      $region52: #{tpu_custom_call.1} parent=5 // pred_fallthru
        _
    $region6: #{tpu_custom_call.1} parent=1 // loop_footer
      %s29 = sadd.s32 1, %s25
    $region7: #{tpu_custom_call.1} parent=1 // loop_footer_branch
      %24 = sbr.rel target = $region3
    $region8: #{tpu_custom_call.1} parent=1 // loop_exit
      _
    %462 = vsyncpa [#allocation5], 1
    %s463 = scalar_lea.sflag [#allocation5], 1
    %464 = vsyncpa %s463, 1
    %465 = vsyncpa [#allocation8], 1
    %466 = vsyncpa [#allocation6], 1
    %s467 = scalar_lea.sflag [#allocation6], 1
    %468 = vsyncpa %s467, 1

</llo_original>
